<compile_context>
chip_gen: v6e
topology: v6e:2x2x1
jax: 0.10.0
libtpu: 0.0.40
codegen_flags: <defaults>
</compile_context>

<pallas_src>
from functools import partial

import jax
import jax.numpy as jnp
from jax.experimental import pallas as pl
from jax.experimental.pallas import tpu as pltpu

LANE = 128       # TPU lane width (last-dim vreg axis)
SUBLANE = 8      # f32 sublane tile
SUBLANE_BF16 = 16


def _round_up(n, m):
    return ((n + m - 1) // m) * m


def smoke_mlp_kernel(x_ref, w_ref, b_ref, o_ref, *, in_cols, h1, h2, out):
    """Fused 3-layer MLP + sigmoid on one batch tile.

    x_ref : (bt, in_cols) bf16
    w_ref : (3, R, C) bf16 slab; layer-i weights live in w_ref[i, :K_i, :N_i]
    b_ref : (3, C) f32 slab; layer-i bias lives in b_ref[i, :N_i]
    Matmuls: bf16 on the MXU, f32 accumulation. Bias/ReLU/sigmoid in f32.
    """
    x = x_ref[...]                                            # bf16 already

    # Layer 1: Linear(input_size -> hidden_size [lane-padded]) + ReLU
    a1 = jnp.dot(x, w_ref[0, :in_cols, :h1],
                 preferred_element_type=jnp.float32)
    a1 = jnp.maximum(a1 + b_ref[0:1, :h1], 0.0)

    # Layer 2: Linear(hidden_size -> hidden_size_2 [lane-padded]) + ReLU
    a2 = jnp.dot(a1.astype(jnp.bfloat16), w_ref[1, :h1, :h2],
                 preferred_element_type=jnp.float32)
    a2 = jnp.maximum(a2 + b_ref[1:2, :h2], 0.0)

    # Layer 3: Linear(hidden_size_2 -> output_size [lane-padded]) + sigmoid
    logits = jnp.dot(a2.astype(jnp.bfloat16), w_ref[2, :h2, :out],
                     preferred_element_type=jnp.float32)
    logits = logits + b_ref[2:3, :out]

    o_ref[...] = jax.nn.sigmoid(logits).astype(o_ref.dtype)


def prepare_params(w1, b1, w2, b2, w3, b3):
    """One-time (outside the jitted per-call path) padding + bf16 cast.

    Weights are (in_features, out_features). Returns a single weight slab,
    a single bias slab, and the static shape metadata for the kernel.
    All padding is zeros, so numerics are exact.
    """
    input_size, hidden = w1.shape
    hidden2 = w2.shape[1]
    output_size = w3.shape[1]

    in_pad = _round_up(input_size, SUBLANE_BF16)   # x feature dim (bf16 sublane)
    h1_pad = _round_up(hidden, LANE)               # 64  -> 128
    h2_pad = _round_up(hidden2, LANE)              # 90  -> 128
    out_pad = _round_up(output_size, LANE)         # 4   -> 128

    R = max(in_pad, h1_pad, h2_pad)                # slab row dim
    C = max(h1_pad, h2_pad, out_pad)               # slab col (lane) dim

    w_slab = jnp.zeros((3, R, C), jnp.bfloat16)
    w_slab = w_slab.at[0, :input_size, :hidden].set(w1.astype(jnp.bfloat16))
    w_slab = w_slab.at[1, :hidden, :hidden2].set(w2.astype(jnp.bfloat16))
    w_slab = w_slab.at[2, :hidden2, :output_size].set(w3.astype(jnp.bfloat16))

    b_slab = jnp.zeros((3, C), jnp.float32)
    b_slab = b_slab.at[0, :hidden].set(b1.astype(jnp.float32))
    b_slab = b_slab.at[1, :hidden2].set(b2.astype(jnp.float32))
    b_slab = b_slab.at[2, :output_size].set(b3.astype(jnp.float32))

    meta = dict(input_size=input_size, in_pad=in_pad, h1_pad=h1_pad,
                h2_pad=h2_pad, out_pad=out_pad, output_size=output_size)
    return w_slab, b_slab, meta


def make_forward(meta):
    """Builds the jitted forward pass for fixed layer sizes."""
    input_size = meta["input_size"]
    in_pad = meta["in_pad"]
    h1_pad, h2_pad = meta["h1_pad"], meta["h2_pad"]
    out_pad, output_size = meta["out_pad"], meta["output_size"]

    kernel = partial(smoke_mlp_kernel, in_cols=in_pad,
                     h1=h1_pad, h2=h2_pad, out=out_pad)

    @jax.jit
    def forward(x, w_slab, b_slab):
        B = x.shape[0]

        # Batch tiling: one big tile up to 512 rows; beyond that, fixed
        # 512-row tiles so the grid has >=2 "parallel" steps (lets v7x's two
        # TensorCores split the batch axis; v5e/v6e just loop).
        if B <= 512:
            bt = _round_up(B, SUBLANE_BF16)
        else:
            bt = 512
        B_pad = _round_up(B, bt)

        # x: pad batch + feature dim with zeros, cast to bf16 (halves the DMA).
        x_p = jnp.pad(x, ((0, B_pad - B), (0, in_pad - input_size))
                      ).astype(jnp.bfloat16)

        grid = (B_pad // bt,)

        out = pl.pallas_call(
            kernel,
            out_shape=jax.ShapeDtypeStruct((B_pad, out_pad), jnp.float32),
            grid=grid,
            in_specs=[
                pl.BlockSpec((bt, in_pad), lambda i: (i, 0)),
                # Weight / bias slabs: full-array blocks, constant index_map
                # (resident across the batch grid, single DMA each).
                pl.BlockSpec(w_slab.shape, lambda i: (0, 0, 0)),
                pl.BlockSpec(b_slab.shape, lambda i: (0, 0)),
            ],
            out_specs=pl.BlockSpec((bt, out_pad), lambda i: (i, 0)),
            compiler_params=pltpu.CompilerParams(
                dimension_semantics=("parallel",)),
        )(x_p, w_slab, b_slab)

        # Strip batch / lane padding.
        return out[:B, :output_size]

    return forward


def init_linear(key, fan_in, fan_out):
    """PyTorch-style uniform(-1/sqrt(fan_in), 1/sqrt(fan_in)) init."""
    kw, kb = jax.random.split(key)
    bound = 1.0 / jnp.sqrt(jnp.float32(fan_in))
    # Stored as (in, out) so the kernel does x @ W (== PyTorch x @ W.T).
    w = jax.random.uniform(kw, (fan_in, fan_out), jnp.float32, -bound, bound)
    b = jax.random.uniform(kb, (fan_out,), jnp.float32, -bound, bound)
    return w, b


def reference_forward(x, w1, b1, w2, b2, w3, b3):
    h1 = jnp.maximum(x @ w1 + b1, 0.0)
    h2 = jnp.maximum(h1 @ w2 + b2, 0.0)
    return jax.nn.sigmoid(h2 @ w3 + b3)


if __name__ == "__main__":
    # Small shapes consistent with the module:
    #   input_size=32, hidden_size=64, hidden_size_2=90 (default), output_size=4
    batch = 16
    input_size, hidden_size, hidden_size_2, output_size = 32, 64, 90, 4

    key = jax.random.PRNGKey(0)
    kx, k1, k2, k3 = jax.random.split(key, 4)

    x = jax.random.normal(kx, (batch, input_size), jnp.float32)
    w1, b1 = init_linear(k1, input_size, hidden_size)
    w2, b2 = init_linear(k2, hidden_size, hidden_size_2)
    w3, b3 = init_linear(k3, hidden_size_2, output_size)

    # One-time parameter prep (padding + bf16) outside the per-call path.
    w_slab, b_slab, meta = prepare_params(w1, b1, w2, b2, w3, b3)
    forward = make_forward(meta)

    out = forward(x, w_slab, b_slab)
    out = jax.block_until_ready(out)

    ref = reference_forward(x, w1, b1, w2, b2, w3, b3)
    assert out.shape == (batch, output_size)
    # bf16 matmuls (f32 accumulate) -> loosened tolerance vs. the f32 reference.
    assert jnp.allclose(out, ref, atol=2e-2, rtol=2e-2), (
        float(jnp.max(jnp.abs(out - ref))))

    print("KERNEL_OK")
</pallas_src>

<mosaic_0001>
module attributes {stable_mosaic.version = 11 : i64} {
  func.func @smoke_mlp_kernel(%arg0: i32, %arg1: memref<16x32xbf16, #tpu.memory_space<vmem>>, %arg2: memref<3x128x128xbf16, #tpu.memory_space<vmem>>, %arg3: memref<3x128xf32, #tpu.memory_space<vmem>>, %arg4: memref<16x128xf32, #tpu.memory_space<vmem>>) attributes {dimension_semantics = [#tpu.dimension_semantics<parallel>], iteration_bounds = array<i64: 1>, scalar_prefetch = 0 : i64, scratch_operands = 0 : i64, tpu.core_type = #tpu.core_type<tc>, window_params = [{transform_indices = @transform_0, window_bounds = array<i64: 16, 32>}, {pipeline_mode = #tpu.pipeline_mode<synchronous>, transform_indices = @transform_1, window_bounds = array<i64: 3, 128, 128>}, {pipeline_mode = #tpu.pipeline_mode<synchronous>, transform_indices = @transform_2, window_bounds = array<i64: 3, 128>}, {transform_indices = @transform_3, window_bounds = array<i64: 16, 128>}]} {
    %c0 = arith.constant 0 : index
    %c0_0 = arith.constant 0 : index
    %0 = vector.load %arg1[%c0, %c0_0] : memref<16x32xbf16, #tpu.memory_space<vmem>>, vector<16x32xbf16>
    %c0_1 = arith.constant 0 : index
    %c0_2 = arith.constant 0 : index
    %c0_3 = arith.constant 0 : index
    %1 = vector.load %arg2[%c0_1, %c0_2, %c0_3] : memref<3x128x128xbf16, #tpu.memory_space<vmem>>, vector<1x32x128xbf16>
    %2 = vector.shape_cast %1 : vector<1x32x128xbf16> to vector<32x128xbf16>
    %cst = arith.constant dense<0.000000e+00> : vector<16x128xf32>
    %3 = tpu.matmul %0, %2, %cst {dimension_numbers = #tpu.dot_dimension_numbers<[1], [0], [0], [1], [0, 0, 1, 1], [], []>} : vector<16x32xbf16>, vector<32x128xbf16>, vector<16x128xf32> -> vector<16x128xf32>
    %c0_4 = arith.constant 0 : index
    %c0_5 = arith.constant 0 : index
    %4 = vector.load %arg3[%c0_4, %c0_5] : memref<3x128xf32, #tpu.memory_space<vmem>>, vector<1x128xf32>
    %5 = vector.broadcast %4 : vector<1x128xf32> to vector<16x128xf32>
    %6 = arith.addf %3, %5 : vector<16x128xf32>
    %cst_6 = arith.constant 0.000000e+00 : f32
    %7 = vector.broadcast %cst_6 : f32 to vector<16x128xf32>
    %8 = arith.maximumf %6, %7 : vector<16x128xf32>
    %9 = arith.truncf %8 : vector<16x128xf32> to vector<16x128xbf16>
    %c1 = arith.constant 1 : index
    %c0_7 = arith.constant 0 : index
    %c0_8 = arith.constant 0 : index
    %10 = vector.load %arg2[%c1, %c0_7, %c0_8] : memref<3x128x128xbf16, #tpu.memory_space<vmem>>, vector<1x128x128xbf16>
    %11 = vector.shape_cast %10 : vector<1x128x128xbf16> to vector<128x128xbf16>
    %cst_9 = arith.constant dense<0.000000e+00> : vector<16x128xf32>
    %12 = tpu.matmul %9, %11, %cst_9 {dimension_numbers = #tpu.dot_dimension_numbers<[1], [0], [0], [1], [0, 0, 1, 1], [], []>} : vector<16x128xbf16>, vector<128x128xbf16>, vector<16x128xf32> -> vector<16x128xf32>
    %c1_10 = arith.constant 1 : index
    %c0_11 = arith.constant 0 : index
    %13 = vector.load %arg3[%c1_10, %c0_11] : memref<3x128xf32, #tpu.memory_space<vmem>>, vector<1x128xf32>
    %14 = vector.broadcast %13 : vector<1x128xf32> to vector<16x128xf32>
    %15 = arith.addf %12, %14 : vector<16x128xf32>
    %cst_12 = arith.constant 0.000000e+00 : f32
    %16 = vector.broadcast %cst_12 : f32 to vector<16x128xf32>
    %17 = arith.maximumf %15, %16 : vector<16x128xf32>
    %18 = arith.truncf %17 : vector<16x128xf32> to vector<16x128xbf16>
    %c2 = arith.constant 2 : index
    %c0_13 = arith.constant 0 : index
    %c0_14 = arith.constant 0 : index
    %19 = vector.load %arg2[%c2, %c0_13, %c0_14] : memref<3x128x128xbf16, #tpu.memory_space<vmem>>, vector<1x128x128xbf16>
    %20 = vector.shape_cast %19 : vector<1x128x128xbf16> to vector<128x128xbf16>
    %cst_15 = arith.constant dense<0.000000e+00> : vector<16x128xf32>
    %21 = tpu.matmul %18, %20, %cst_15 {dimension_numbers = #tpu.dot_dimension_numbers<[1], [0], [0], [1], [0, 0, 1, 1], [], []>} : vector<16x128xbf16>, vector<128x128xbf16>, vector<16x128xf32> -> vector<16x128xf32>
    %c2_16 = arith.constant 2 : index
    %c0_17 = arith.constant 0 : index
    %22 = vector.load %arg3[%c2_16, %c0_17] : memref<3x128xf32, #tpu.memory_space<vmem>>, vector<1x128xf32>
    %23 = vector.broadcast %22 : vector<1x128xf32> to vector<16x128xf32>
    %24 = arith.addf %21, %23 : vector<16x128xf32>
    %25 = arith.negf %24 : vector<16x128xf32>
    %26 = math.exp %25 : vector<16x128xf32>
    %cst_18 = arith.constant 1.000000e+00 : f32
    %27 = vector.broadcast %cst_18 : f32 to vector<16x128xf32>
    %28 = arith.addf %27, %26 : vector<16x128xf32>
    %29 = arith.divf %27, %28 : vector<16x128xf32>
    %c0_19 = arith.constant 0 : index
    %c0_20 = arith.constant 0 : index
    %30 = vector.load %arg4[%c0_19, %c0_20] : memref<16x128xf32, #tpu.memory_space<vmem>>, vector<16x128xf32>
    tpu.vector_store %arg4[%c0_19, %c0_20], %29 {strides = array<i32>} : memref<16x128xf32, #tpu.memory_space<vmem>>, vector<16x128xf32>,
    return
  }
  func.func @transform_0(%arg0: i32) -> (i32, i32) {
    %c0_i32 = arith.constant 0 : i32
    %c0_i32_0 = arith.constant 0 : i32
    return %arg0, %c0_i32 : i32, i32
  }
  func.func @transform_1(%arg0: i32) -> (i32, i32, i32) {
    %c0_i32 = arith.constant 0 : i32
    %c0_i32_0 = arith.constant 0 : i32
    %c0_i32_1 = arith.constant 0 : i32
    %c0_i32_2 = arith.constant 0 : i32
    return %c0_i32, %c0_i32_0, %c0_i32_1 : i32, i32, i32
  }
  func.func @transform_2(%arg0: i32) -> (i32, i32) {
    %c0_i32 = arith.constant 0 : i32
    %c0_i32_0 = arith.constant 0 : i32
    %c0_i32_1 = arith.constant 0 : i32
    return %c0_i32, %c0_i32_0 : i32, i32
  }
  func.func @transform_3(%arg0: i32) -> (i32, i32) {
    %c0_i32 = arith.constant 0 : i32
    %c0_i32_0 = arith.constant 0 : i32
    return %arg0, %c0_i32 : i32, i32
  }
}

</mosaic_0001>

<llo_original>
// kernel: forward.1
$region0: #{forward.1}
  #allocation0 [shape = 'u32[]', space=smem, size = 0x4, offset = 0x4, fixed_abs, tag = 'smem constant byte address 0x4 - core index']
  #allocation1 [shape = 'u32[144,128]{1,0:T(1,128)}', space=vmem, size = 0x12000, scoped, tag = 'internal scratch']
  %s0 = inlined_call_operand.vmem [shape: bf16[16,32], index: 0, kind: input, shape index: {}]
  %s1 = inlined_call_operand.hbm [shape: bf16[3,128,128], index: 1, kind: input, shape index: {}]
  %s2 = inlined_call_operand.vmem [shape: f32[3,128], index: 2, kind: input, shape index: {}]
  %s3 = inlined_call_operand.vmem [shape: f32[16,128], index: 3, kind: output, shape index: {}]
  %s4 = sld [smem:[#allocation0]]
  $region26: #{forward.1} parent=0
    _
  %s6 = ssub.s32 1, %s4
  %s7 = scalar_select 0, %s6, %s4
  $region1: #{forward.1} parent=0
    #allocation2 [shape = 'u8[98304]{0}', space=vmem, size = 0x18000, scoped, tag = 'input window, operand 1, single buffered']
    #allocation3 [shape = 's32[1]{0}', space=sflag, size = 0x4, scoped, tag = 'scoped memory for forward.1']
    %8 = vsyncpa [#allocation3], 0
    // Predicated region
    $region2: #{forward.1} parent=1 // pred_check
      _
    $region3: #{forward.1} parent=1 // pred_check_branch
      %10 = sbr.rel (0) target = $region5
    $region4: #{forward.1} parent=1 // pred_region
      _
    $region5: #{forward.1} parent=1 // pred_fallthru
      _
    // Predicated region
    $region6: #{forward.1} parent=1 // pred_check
      _
    $region7: #{forward.1} parent=1 // pred_check_branch
      %12 = sbr.rel (0) target = $region9
    $region8: #{forward.1} parent=1 // pred_region
      %s14 = ssub.s32 3072, 3072
      %15 = vsyncadd [#allocation3], %s14
      %s16 = sshll.u32 [#allocation2], 4
      %s17 = int_to_ptr.vmem [resolvable:$true] %s16
      %22 = dma.hbm_to_vmem [thread:$0]  %s1, 3072, %s17, [#allocation3], 64, 64, 4
    $region9: #{forward.1} parent=1 // pred_fallthru
      _
    // Predicated region
    $region10: #{forward.1} parent=1 // pred_check
      _
    $region11: #{forward.1} parent=1 // pred_check_branch
      %24 = sbr.rel (0) target = $region13
    $region12: #{forward.1} parent=1 // pred_region
      _
    $region13: #{forward.1} parent=1 // pred_fallthru
      _
    // Predicated region
    $region14: #{forward.1} parent=1 // pred_check
      _
    $region15: #{forward.1} parent=1 // pred_check_branch
      %26 = sbr.rel (0) target = $region17
    $region16: #{forward.1} parent=1 // pred_region
      %27 = dma.done [#allocation3], 3072
    $region17: #{forward.1} parent=1 // pred_fallthru
      _
    %v29 = vld [vmem:[%s0] sm:$0xf]
    %v30 = vld [vmem:[%s0 + $0x4] sm:$0xf]
    %v31 = vld [vmem:[#allocation2] sm:$0xf]
    %v32 = vld [vmem:[#allocation2 + $0x4] sm:$0xf]
    %v33 = vld [vmem:[#allocation2 + $0x8] sm:$0xf]
    %v34 = vld [vmem:[#allocation2 + $0xc] sm:$0xf]
    %v35 = vld [vmem:[%s2] sm:$0x1]
    %v36 = vlaneseq
    %v37 = vshrl.u32 %v36, 7
    %v38 = vsub.s32 0, %v37
    %v39 = vrot.slane %v35, %v38
    %v42 = vunpack.c.l.b16 %v29
    %v43 = vunpack.c.l.b16 %v30
    %v44 = vpack.c.b16 %v43, %v42
    %v49 = vunpack.c.l.b16 %v31
    %v50 = vunpack.c.l.b16 %v32
    %v51 = vunpack.c.l.b16 %v33
    %v52 = vunpack.c.l.b16 %v34
    %v53 = vpack.c.b16 %v50, %v49
    %v54 = vpack.c.b16 %v52, %v51
    %vm57 = vcmask 261120
    %v59 = vsel %vm57, %v44, 0
    %61 = vmatprep.subr.bf16.mxu0 0
    %62 = vmatpush1.bf16.msra.mxu0 0
    %63 = vmatprep.subr.bf16.mxu0 0
    %64 = vmatpush1.bf16.msra.mxu0 0
    %65 = vmatprep.subr.bf16.mxu0 0
    %66 = vmatpush1.bf16.msra.mxu0 0
    %67 = vmatprep.subr.bf16.mxu0 0
    %68 = vmatpush1.bf16.msra.mxu0 0
    %69 = vmatprep.subr.bf16.mxu0 0
    %70 = vmatpush1.bf16.msra.mxu0 0
    %71 = vmatprep.subr.bf16.mxu0 0
    %72 = vmatpush1.bf16.msra.mxu0 0
    %73 = vmatprep.subr.bf16.mxu0 0
    %74 = vmatpush1.bf16.msra.mxu0 %v54
    %75 = vmatprep.subr.bf16.mxu0 0
    %76 = vmatpush1.bf16.msra.mxu0 %v53
    %77 = vmatprep.subr.bf16.mxu0 0
    %78 = vmatpush2.bf16.msra.mxu0 0
    %79 = vmatprep.subr.bf16.mxu0 0
    %80 = vmatpush2.bf16.msra.mxu0 0
    %81 = vmatprep.subr.bf16.mxu0 0
    %82 = vmatpush2.bf16.msra.mxu0 0
    %83 = vmatprep.subr.bf16.mxu0 0
    %84 = vmatpush2.bf16.msra.mxu0 0
    %85 = vmatprep.subr.bf16.mxu0 0
    %86 = vmatpush2.bf16.msra.mxu0 0
    %87 = vmatprep.subr.bf16.mxu0 0
    %88 = vmatpush2.bf16.msra.mxu0 0
    %89 = vmatprep.subr.bf16.mxu0 0
    %90 = vmatpush2.bf16.msra.mxu0 0
    %91 = vmatprep.subr.bf16.mxu0 0
    %92 = vmatpush2.bf16.msra.mxu0 0
    %93 = vmatprep.mubr.bf16.mxu0 0
    %94 = vmatmul.mubr.bf16.gmra.mxu0 %v59
    %v95 = vpop.f32.mrf.mxu0
    %v96 = vadd.f32 %v39, %v95
    %v97 = vpop.f32.mrf.mxu0
    %v98 = vpop.f32.mrf.mxu0
    %v99 = vadd.f32 %v39, %v98
    %v100 = vpop.f32.mrf.mxu0
    %101 = vdwg.mxu0
    %v102 = vmax.f32 %v96, 0.0
    %v103 = vmax.f32 %v99, 0.0
    %v104 = vpack.c.bf16 %v103, %v102
    %s105 = scalar_lea.vmem [#allocation2], 64
    %v106 = vld [vmem:[%s105] sm:$0xf]
    %v107 = vld [vmem:[%s105 + $0x4] sm:$0xf]
    %v108 = vld [vmem:[%s105 + $0x8] sm:$0xf]
    %v109 = vld [vmem:[%s105 + $0xc] sm:$0xf]
    %v110 = vld [vmem:[%s105 + $0x10] sm:$0xf]
    %v111 = vld [vmem:[%s105 + $0x14] sm:$0xf]
    %v112 = vld [vmem:[%s105 + $0x18] sm:$0xf]
    %v113 = vld [vmem:[%s105 + $0x1c] sm:$0xf]
    %v114 = vld [vmem:[%s105 + $0x20] sm:$0xf]
    %v115 = vld [vmem:[%s105 + $0x24] sm:$0xf]
    %v116 = vld [vmem:[%s105 + $0x28] sm:$0xf]
    %v117 = vld [vmem:[%s105 + $0x2c] sm:$0xf]
    %v118 = vld [vmem:[%s105 + $0x30] sm:$0xf]
    %v119 = vld [vmem:[%s105 + $0x34] sm:$0xf]
    %v120 = vld [vmem:[%s105 + $0x38] sm:$0xf]
    %v121 = vld [vmem:[%s105 + $0x3c] sm:$0xf]
    %v122 = vld [vmem:[%s2 + $0x1] sm:$0x1]
    %v123 = vlaneseq
    %v124 = vshrl.u32 %v123, 7
    %v125 = vsub.s32 0, %v124
    %v126 = vrot.slane %v122, %v125
    %v143 = vunpack.c.l.b16 %v106
    %v144 = vunpack.c.l.b16 %v107
    %v145 = vunpack.c.l.b16 %v108
    %v146 = vunpack.c.l.b16 %v109
    %v147 = vunpack.c.l.b16 %v110
    %v148 = vunpack.c.l.b16 %v111
    %v149 = vunpack.c.l.b16 %v112
    %v150 = vunpack.c.l.b16 %v113
    %v151 = vunpack.c.l.b16 %v114
    %v152 = vunpack.c.l.b16 %v115
    %v153 = vunpack.c.l.b16 %v116
    %v154 = vunpack.c.l.b16 %v117
    %v155 = vunpack.c.l.b16 %v118
    %v156 = vunpack.c.l.b16 %v119
    %v157 = vunpack.c.l.b16 %v120
    %v158 = vunpack.c.l.b16 %v121
    %v159 = vpack.c.b16 %v144, %v143
    %v160 = vpack.c.b16 %v146, %v145
    %v161 = vpack.c.b16 %v148, %v147
    %v162 = vpack.c.b16 %v150, %v149
    %v163 = vpack.c.b16 %v152, %v151
    %v164 = vpack.c.b16 %v154, %v153
    %v165 = vpack.c.b16 %v156, %v155
    %v166 = vpack.c.b16 %v158, %v157
    %175 = vmatprep.subr.bf16.mxu0 0
    %176 = vmatpush1.bf16.msra.mxu0 %v166
    %177 = vmatprep.subr.bf16.mxu0 0
    %178 = vmatpush1.bf16.msra.mxu0 %v165
    %179 = vmatprep.subr.bf16.mxu0 0
    %180 = vmatpush1.bf16.msra.mxu0 %v164
    %181 = vmatprep.subr.bf16.mxu0 0
    %182 = vmatpush1.bf16.msra.mxu0 %v163
    %183 = vmatprep.subr.bf16.mxu0 0
    %184 = vmatpush1.bf16.msra.mxu0 %v162
    %185 = vmatprep.subr.bf16.mxu0 0
    %186 = vmatpush1.bf16.msra.mxu0 %v161
    %187 = vmatprep.subr.bf16.mxu0 0
    %188 = vmatpush1.bf16.msra.mxu0 %v160
    %189 = vmatprep.subr.bf16.mxu0 0
    %190 = vmatpush1.bf16.msra.mxu0 %v159
    %191 = vmatprep.subr.bf16.mxu0 0
    %192 = vmatpush2.bf16.msra.mxu0 0
    %193 = vmatprep.subr.bf16.mxu0 0
    %194 = vmatpush2.bf16.msra.mxu0 0
    %195 = vmatprep.subr.bf16.mxu0 0
    %196 = vmatpush2.bf16.msra.mxu0 0
    %197 = vmatprep.subr.bf16.mxu0 0
    %198 = vmatpush2.bf16.msra.mxu0 0
    %199 = vmatprep.subr.bf16.mxu0 0
    %200 = vmatpush2.bf16.msra.mxu0 0
    %201 = vmatprep.subr.bf16.mxu0 0
    %202 = vmatpush2.bf16.msra.mxu0 0
    %203 = vmatprep.subr.bf16.mxu0 0
    %204 = vmatpush2.bf16.msra.mxu0 0
    %205 = vmatprep.subr.bf16.mxu0 0
    %206 = vmatpush2.bf16.msra.mxu0 0
    %207 = vmatprep.mubr.bf16.mxu0 0
    %208 = vmatmul.mubr.bf16.gmra.mxu0 %v104
    %v209 = vpop.f32.mrf.mxu0
    %v210 = vadd.f32 %v126, %v209
    %v211 = vpop.f32.mrf.mxu0
    %v212 = vpop.f32.mrf.mxu0
    %v213 = vadd.f32 %v126, %v212
    %v214 = vpop.f32.mrf.mxu0
    %215 = vdwg.mxu0
    %v216 = vmax.f32 %v210, 0.0
    %v217 = vmax.f32 %v213, 0.0
    %v218 = vpack.c.bf16 %v217, %v216
    %s219 = scalar_lea.vmem [#allocation2], 128
    %v220 = vld [vmem:[%s219] sm:$0xf]
    %v221 = vld [vmem:[%s219 + $0x4] sm:$0xf]
    %v222 = vld [vmem:[%s219 + $0x8] sm:$0xf]
    %v223 = vld [vmem:[%s219 + $0xc] sm:$0xf]
    %v224 = vld [vmem:[%s219 + $0x10] sm:$0xf]
    %v225 = vld [vmem:[%s219 + $0x14] sm:$0xf]
    %v226 = vld [vmem:[%s219 + $0x18] sm:$0xf]
    %v227 = vld [vmem:[%s219 + $0x1c] sm:$0xf]
    %v228 = vld [vmem:[%s219 + $0x20] sm:$0xf]
    %v229 = vld [vmem:[%s219 + $0x24] sm:$0xf]
    %v230 = vld [vmem:[%s219 + $0x28] sm:$0xf]
    %v231 = vld [vmem:[%s219 + $0x2c] sm:$0xf]
    %v232 = vld [vmem:[%s219 + $0x30] sm:$0xf]
    %v233 = vld [vmem:[%s219 + $0x34] sm:$0xf]
    %v234 = vld [vmem:[%s219 + $0x38] sm:$0xf]
    %v235 = vld [vmem:[%s219 + $0x3c] sm:$0xf]
    %v236 = vld [vmem:[%s2 + $0x2] sm:$0x1]
    %v237 = vlaneseq
    %v238 = vshrl.u32 %v237, 7
    %v239 = vsub.s32 0, %v238
    %v240 = vrot.slane %v236, %v239
    %v257 = vunpack.c.l.b16 %v220
    %v258 = vunpack.c.l.b16 %v221
    %v259 = vunpack.c.l.b16 %v222
    %v260 = vunpack.c.l.b16 %v223
    %v261 = vunpack.c.l.b16 %v224
    %v262 = vunpack.c.l.b16 %v225
    %v263 = vunpack.c.l.b16 %v226
    %v264 = vunpack.c.l.b16 %v227
    %v265 = vunpack.c.l.b16 %v228
    %v266 = vunpack.c.l.b16 %v229
    %v267 = vunpack.c.l.b16 %v230
    %v268 = vunpack.c.l.b16 %v231
    %v269 = vunpack.c.l.b16 %v232
    %v270 = vunpack.c.l.b16 %v233
    %v271 = vunpack.c.l.b16 %v234
    %v272 = vunpack.c.l.b16 %v235
    %v273 = vpack.c.b16 %v258, %v257
    %v274 = vpack.c.b16 %v260, %v259
    %v275 = vpack.c.b16 %v262, %v261
    %v276 = vpack.c.b16 %v264, %v263
    %v277 = vpack.c.b16 %v266, %v265
    %v278 = vpack.c.b16 %v268, %v267
    %v279 = vpack.c.b16 %v270, %v269
    %v280 = vpack.c.b16 %v272, %v271
    %289 = vmatprep.subr.bf16.mxu0 0
    %290 = vmatpush1.bf16.msra.mxu0 %v280
    %291 = vmatprep.subr.bf16.mxu0 0
    %292 = vmatpush1.bf16.msra.mxu0 %v279
    %293 = vmatprep.subr.bf16.mxu0 0
    %294 = vmatpush1.bf16.msra.mxu0 %v278
    %295 = vmatprep.subr.bf16.mxu0 0
    %296 = vmatpush1.bf16.msra.mxu0 %v277
    %297 = vmatprep.subr.bf16.mxu0 0
    %298 = vmatpush1.bf16.msra.mxu0 %v276
    %299 = vmatprep.subr.bf16.mxu0 0
    %300 = vmatpush1.bf16.msra.mxu0 %v275
    %301 = vmatprep.subr.bf16.mxu0 0
    %302 = vmatpush1.bf16.msra.mxu0 %v274
    %303 = vmatprep.subr.bf16.mxu0 0
    %304 = vmatpush1.bf16.msra.mxu0 %v273
    %305 = vmatprep.subr.bf16.mxu0 0
    %306 = vmatpush2.bf16.msra.mxu0 0
    %307 = vmatprep.subr.bf16.mxu0 0
    %308 = vmatpush2.bf16.msra.mxu0 0
    %309 = vmatprep.subr.bf16.mxu0 0
    %310 = vmatpush2.bf16.msra.mxu0 0
    %311 = vmatprep.subr.bf16.mxu0 0
    %312 = vmatpush2.bf16.msra.mxu0 0
    %313 = vmatprep.subr.bf16.mxu0 0
    %314 = vmatpush2.bf16.msra.mxu0 0
    %315 = vmatprep.subr.bf16.mxu0 0
    %316 = vmatpush2.bf16.msra.mxu0 0
    %317 = vmatprep.subr.bf16.mxu0 0
    %318 = vmatpush2.bf16.msra.mxu0 0
    %319 = vmatprep.subr.bf16.mxu0 0
    %320 = vmatpush2.bf16.msra.mxu0 0
    %321 = vmatprep.mubr.bf16.mxu0 0
    %322 = vmatmul.mubr.bf16.gmra.mxu0 %v218
    %v323 = vpop.f32.mrf.mxu0
    %v324 = vadd.f32 %v240, %v323
    %v325 = vpop.f32.mrf.mxu0
    %v326 = vpop.f32.mrf.mxu0
    %v327 = vadd.f32 %v240, %v326
    %v328 = vpop.f32.mrf.mxu0
    %329 = vdwg.mxu0
    %v330 = vxor.u32 %v324, 2147483648
    %v331 = vxor.u32 %v327, 2147483648
    %v332 = vmul.f32 %v330, 1.442695
    %v333 = vpow.pop %v332
    %v334 = vmul.f32 %v331, 1.442695
    %v335 = vpow.pop %v334
    %v336 = vadd.f32 %v333, 1.0
    %v337 = vadd.f32 %v335, 1.0
    %v338 = vrcp.pop %v336
    %v339 = vmul.f32 1.0, %v338
    %v340 = vrcp.pop %v337
    %v341 = vmul.f32 1.0, %v340
    %342 = vst [vmem:[%s3] sm:$0xff] %v339
    %343 = vst [vmem:[%s3 + $0x8] sm:$0xff] %v341
    // Predicated region
    $region18: #{forward.1} parent=1 // pred_check
      _
    $region19: #{forward.1} parent=1 // pred_check_branch
      %345 = sbr.rel (0) target = $region21
    $region20: #{forward.1} parent=1 // pred_region
      _
    $region21: #{forward.1} parent=1 // pred_fallthru
      _
    // Predicated region
    $region22: #{forward.1} parent=1 // pred_check
      _
    $region23: #{forward.1} parent=1 // pred_check_branch
      %347 = sbr.rel (0) target = $region25
    $region24: #{forward.1} parent=1 // pred_region
      _
    $region25: #{forward.1} parent=1 // pred_fallthru
      _
    %348 = vsyncpa [#allocation3], 1

</llo_original>
